<compile_context>
chip_gen: v7x
topology: tpu7x:2x2x1
jax: 0.10.0
libtpu: 0.0.40
codegen_flags: <defaults>
</compile_context>

<pallas_src>
import functools

import jax
import jax.numpy as jnp
from jax.experimental import pallas as pl
from jax.experimental.pallas import tpu as pltpu


def _round_up(x: int, m: int) -> int:
    return ((x + m - 1) // m) * m


def _cdiv(a: int, b: int) -> int:
    return -(-a // b)


def _const_block_spec(block_shape, index_map):
    """BlockSpec for a grid-constant block; single-buffered when the API allows it."""
    try:
        return pl.BlockSpec(block_shape, index_map, pipeline_mode=pl.Buffered(1))
    except (TypeError, AttributeError):   # older jax without pipeline_mode / Buffered
        return pl.BlockSpec(block_shape, index_map)


def _vmem_cap_bytes() -> int:
    """Physical-VMEM-aware cap (v7x: 64 MiB/TC, v5e/v6e: 128 MiB) with headroom."""
    try:
        phys = int(pltpu.get_tpu_info().vmem_capacity_bytes)
    except Exception:
        phys = 64 << 20              # conservative (v7x) if the query is unavailable
    return min(phys - (8 << 20), 100 << 20)


# ---------------------------------------------------------------------------
# Kernels
# ---------------------------------------------------------------------------
def _neural_dnf_kernel(x_ref, wc_t_ref, wd_t_ref, cbias_ref, dbias_ref, out_ref):
    """Fused two-layer semi-symbolic forward for one batch tile (weights resident).

    x_ref     : VMEM (TM, n_in) x batch tile (unpadded K)
    wc_t_ref  : VMEM (n_in, Cp) conjunction weights, pre-transposed + lane-padded
    wd_t_ref  : VMEM (Cp, Np)   disjunction weights, pre-transposed + lane-padded
    cbias_ref : VMEM (1, Cp)    delta * (max|Wc| - sum|Wc|)
    dbias_ref : VMEM (1, Np)    delta * (sum|Wd| - max|Wd|)
    out_ref   : VMEM (TM, Np)   f32
    """
    conj = jnp.tanh(
        jnp.dot(x_ref[...], wc_t_ref[...], preferred_element_type=jnp.float32)
        + cbias_ref[...]
    )
    out_ref[...] = (
        jnp.dot(conj.astype(wd_t_ref.dtype), wd_t_ref[...],
                preferred_element_type=jnp.float32)
        + dbias_ref[...]
    ).astype(out_ref.dtype)


def _neural_dnf_conj_tiled_kernel(x_ref, wc_t_ref, wd_t_ref, cbias_ref, dbias_ref,
                                  out_ref, acc_ref):
    """Fallback for large layers: reduction grid axis over conjunction tiles."""
    c = pl.program_id(1)

    @pl.when(c == 0)
    def _():
        acc_ref[...] = jnp.zeros_like(acc_ref)

    conj = jnp.tanh(
        jnp.dot(x_ref[...], wc_t_ref[...], preferred_element_type=jnp.float32)
        + cbias_ref[...]
    )
    acc_ref[...] += jnp.dot(conj.astype(wd_t_ref.dtype), wd_t_ref[...],
                            preferred_element_type=jnp.float32)

    @pl.when(c == pl.num_programs(1) - 1)
    def _():
        out_ref[...] = (acc_ref[...] + dbias_ref[...]).astype(out_ref.dtype)


# ---------------------------------------------------------------------------
# Wrapper
# ---------------------------------------------------------------------------
@functools.partial(jax.jit,
                   static_argnames=("block_m", "use_bf16", "vmem_limit_bytes"))
def neural_dnf_forward(x, conj_weights, disj_weights, delta,
                       block_m: int = 1024, use_bf16: bool = False,
                       vmem_limit_bytes=None):
    """x: [B, n_in]; conj_weights: [n_conj, n_in]; disj_weights: [n_out, n_conj]
    (PyTorch layout).  Returns [B, n_out] float32."""
    x = jnp.asarray(x, jnp.float32)
    wc = jnp.asarray(conj_weights, jnp.float32)       # (n_conj, n_in)
    wd = jnp.asarray(disj_weights, jnp.float32)       # (n_out, n_conj)

    B, n_in = x.shape
    n_conj = wc.shape[0]
    n_out = wd.shape[0]

    # ---- Hoist batch-independent bias math (already scaled by delta) ----
    abs_wc = jnp.abs(wc)
    conj_bias = delta * (jnp.max(abs_wc, axis=1) - jnp.sum(abs_wc, axis=1))  # (n_conj,)
    abs_wd = jnp.abs(wd)
    disj_bias = delta * (jnp.sum(abs_wd, axis=1) - jnp.max(abs_wd, axis=1))  # (n_out,)

    # ---- Lane-dense padding ONLY on the conjunction / output dims (weights are
    #      KB-scale, loaded once; x is passed unpadded to keep its HBM read minimal).
    Cp = _round_up(n_conj, 128)
    Np = _round_up(n_out, 128)

    cap = _vmem_cap_bytes()
    mm_dtype = jnp.bfloat16 if use_bf16 else jnp.float32
    wbytes = 2 if use_bf16 else 4

    # Fast path requires both weight matrices VMEM-resident; otherwise tile n_conj.
    use_conj_tiling = wbytes * (n_in * Cp + Cp * Np) > cap // 2

    # Batch tile: multiple of 8 sublanes; at least 2 tiles whenever B allows, so the
    # "parallel" batch axis spans both v7x TensorCores (harmless on v5e/v6e).
    tm = min(block_m, max(8, _round_up(_cdiv(B, 2), 8)))

    if use_conj_tiling:
        tc = Cp
        while wbytes * tc * (n_in + Np) > cap // 4 and tc > 128:
            tc = max(128, _round_up(tc // 2, 128))
        Cp = _round_up(Cp, tc)            # make Cp an exact multiple of the conj tile
    else:
        tc = Cp

    def _vmem_needed(tm_: int) -> int:
        resident = wbytes * (n_in * tc + tc * Np) + 4 * (tc + Np)   # single-buffered
        xbytes = 2 if use_bf16 else 4
        per_step = xbytes * tm_ * n_in + 4 * tm_ * Np               # x tile + out tile
        scratch = 4 * tm_ * (tc + Np)                               # conj + accumulator
        # Resident counted once (Buffered(1)); add an equal margin in case the runtime
        # still multi-buffers it, plus ~2 MiB compiler-internal scratch headroom.
        return 2 * resident + 2 * per_step + scratch + (2 << 20)

    while _vmem_needed(tm) > cap and tm > 8:
        tm = max(8, _round_up(tm // 2, 8))

    grid_m = _cdiv(B, tm)

    if vmem_limit_bytes is None:
        vmem_limit_bytes = int(min(max(_vmem_needed(tm), 16 << 20), cap))

    # Weight transpose + pad: a single tiny copy fused under jit (amortized vs x traffic).
    wc_t = jnp.pad(wc.T, ((0, 0), (0, Cp - n_conj))).astype(mm_dtype)            # (n_in, Cp)
    wd_t = jnp.pad(wd.T, ((0, Cp - n_conj), (0, Np - n_out))).astype(mm_dtype)   # (Cp, Np)
    cbias = jnp.pad(conj_bias, (0, Cp - n_conj)).reshape(1, Cp).astype(jnp.float32)
    dbias = jnp.pad(disj_bias, (0, Np - n_out)).reshape(1, Np).astype(jnp.float32)
    x_mm = x.astype(mm_dtype)
    # Padded conjunction columns: zero weights + zero bias -> tanh(0)=0, and the matching
    # Wd^T rows are zero, so they contribute nothing.  Padded output lanes sliced below.
    # Rows of the (possibly partial) last batch tile beyond B are never written back.

    cost = pl.CostEstimate(
        flops=2 * B * n_in * Cp + 2 * B * Cp * Np,
        transcendentals=B * Cp,
        bytes_accessed=wbytes * (B * n_in + n_in * Cp + Cp * Np)
        + 4 * (Cp + Np + B * Np),
    )

    if not use_conj_tiling:
        out_p = pl.pallas_call(
            _neural_dnf_kernel,
            out_shape=jax.ShapeDtypeStruct((B, Np), jnp.float32),
            grid=(grid_m,),
            in_specs=[
                pl.BlockSpec((tm, n_in), lambda i: (i, 0)),       # x: batch-tiled, K unpadded
                _const_block_spec((n_in, Cp), lambda i: (0, 0)),  # Wc^T: VMEM-resident
                _const_block_spec((Cp, Np), lambda i: (0, 0)),    # Wd^T: VMEM-resident
                _const_block_spec((1, Cp), lambda i: (0, 0)),     # delta * conj bias
                _const_block_spec((1, Np), lambda i: (0, 0)),     # delta * disj bias
            ],
            out_specs=pl.BlockSpec((tm, Np), lambda i: (i, 0)),
            compiler_params=pltpu.CompilerParams(
                dimension_semantics=("parallel",),
                vmem_limit_bytes=vmem_limit_bytes,
            ),
            cost_estimate=cost,
        )(x_mm, wc_t, wd_t, cbias, dbias)
    else:
        grid_c = Cp // tc
        out_p = pl.pallas_call(
            _neural_dnf_conj_tiled_kernel,
            out_shape=jax.ShapeDtypeStruct((B, Np), jnp.float32),
            grid=(grid_m, grid_c),
            in_specs=[
                pl.BlockSpec((tm, n_in), lambda i, c: (i, 0)),    # x: constant over c
                pl.BlockSpec((n_in, tc), lambda i, c: (0, c)),    # Wc^T conj tile
                pl.BlockSpec((tc, Np), lambda i, c: (c, 0)),      # Wd^T conj tile
                pl.BlockSpec((1, tc), lambda i, c: (0, c)),       # conj bias tile
                _const_block_spec((1, Np), lambda i, c: (0, 0)),  # disj bias (constant)
            ],
            out_specs=pl.BlockSpec((tm, Np), lambda i, c: (i, 0)),
            scratch_shapes=[pltpu.VMEM((tm, Np), jnp.float32)],
            compiler_params=pltpu.CompilerParams(
                dimension_semantics=("parallel", "arbitrary"),
                vmem_limit_bytes=vmem_limit_bytes,
            ),
            cost_estimate=cost,
        )(x_mm, wc_t, wd_t, cbias, dbias)

    # Lane slice only when the output dim was padded (no batch-dim slice/copy).
    return out_p if Np == n_out else out_p[:, :n_out]


def reference_forward(x, conj_weights, disj_weights, delta):
    """Pure-JAX reference mirroring the PyTorch module."""
    abs_wc = jnp.abs(conj_weights)                            # (n_conj, n_in)
    conj_bias = jnp.max(abs_wc, axis=1) - jnp.sum(abs_wc, axis=1)
    conj = jnp.tanh(x @ conj_weights.T + delta * conj_bias[None, :])
    abs_wd = jnp.abs(disj_weights)                            # (n_out, n_conj)
    disj_bias = jnp.sum(abs_wd, axis=1) - jnp.max(abs_wd, axis=1)
    return conj @ disj_weights.T + delta * disj_bias[None, :]


if __name__ == "__main__":
    # Module hyperparameters (small, consistent with BaseNeuralDNF.__init__):
    n_in, n_conjunctions, n_out = 32, 16, 8
    delta = 0.5
    batch = 8

    key = jax.random.PRNGKey(0)
    kx, kc, kd = jax.random.split(key, 3)

    # Deterministic "normal" weight init (weight_init_type='normal'), std=0.1.
    x = jax.random.normal(kx, (batch, n_in), dtype=jnp.float32)
    conj_weights = 0.1 * jax.random.normal(
        kc, (n_conjunctions, n_in), dtype=jnp.float32)        # conjunctions.weights
    disj_weights = 0.1 * jax.random.normal(
        kd, (n_out, n_conjunctions), dtype=jnp.float32)       # disjunctions.weights

    out = neural_dnf_forward(x, conj_weights, disj_weights, delta)
    out = jax.block_until_ready(out)

    ref = reference_forward(x, conj_weights, disj_weights, delta)
    assert out.shape == (batch, n_out), out.shape
    assert jnp.allclose(out, ref, atol=1e-5, rtol=1e-5), "mismatch vs reference"

    # TODO(synk): weight-mask finetuning hooks / delta setters are host-side module
    # bookkeeping with no kernel equivalent; only forward() is implemented here.
    print("KERNEL_OK")
</pallas_src>

<mosaic_0001>
module attributes {stable_mosaic.version = 11 : i64} {
  func.func @_neural_dnf_kernel(%arg0: i32, %arg1: memref<8x32xf32, #tpu.memory_space<vmem>>, %arg2: memref<32x128xf32, #tpu.memory_space<vmem>>, %arg3: memref<128x128xf32, #tpu.memory_space<vmem>>, %arg4: memref<1x128xf32, #tpu.memory_space<vmem>>, %arg5: memref<1x128xf32, #tpu.memory_space<vmem>>, %arg6: memref<8x128xf32, #tpu.memory_space<vmem>>) attributes {dimension_semantics = [#tpu.dimension_semantics<parallel>], iteration_bounds = array<i64: 1>, scalar_prefetch = 0 : i64, scratch_operands = 0 : i64, tpu.core_type = #tpu.core_type<tc>, window_params = [{transform_indices = @transform_0, window_bounds = array<i64: 8, 32>}, {pipeline_mode = #tpu.pipeline_mode<synchronous>, transform_indices = @transform_1, window_bounds = array<i64: 32, 128>}, {pipeline_mode = #tpu.pipeline_mode<synchronous>, transform_indices = @transform_2, window_bounds = array<i64: 128, 128>}, {pipeline_mode = #tpu.pipeline_mode<synchronous>, transform_indices = @transform_3, window_bounds = array<i64: 1, 128>}, {pipeline_mode = #tpu.pipeline_mode<synchronous>, transform_indices = @transform_4, window_bounds = array<i64: 1, 128>}, {transform_indices = @transform_5, window_bounds = array<i64: 8, 128>}]} {
    %c0 = arith.constant 0 : index
    %c0_0 = arith.constant 0 : index
    %0 = vector.load %arg1[%c0, %c0_0] : memref<8x32xf32, #tpu.memory_space<vmem>>, vector<8x32xf32>
    %c0_1 = arith.constant 0 : index
    %c0_2 = arith.constant 0 : index
    %1 = vector.load %arg2[%c0_1, %c0_2] : memref<32x128xf32, #tpu.memory_space<vmem>>, vector<32x128xf32>
    %cst = arith.constant dense<0.000000e+00> : vector<8x128xf32>
    %2 = tpu.matmul %0, %1, %cst {dimension_numbers = #tpu.dot_dimension_numbers<[1], [0], [0], [1], [0, 0, 1, 1], [], []>} : vector<8x32xf32>, vector<32x128xf32>, vector<8x128xf32> -> vector<8x128xf32>
    %c0_3 = arith.constant 0 : index
    %c0_4 = arith.constant 0 : index
    %3 = vector.load %arg4[%c0_3, %c0_4] : memref<1x128xf32, #tpu.memory_space<vmem>>, vector<1x128xf32>
    %4 = vector.broadcast %3 : vector<1x128xf32> to vector<8x128xf32>
    %5 = arith.addf %2, %4 : vector<8x128xf32>
    %6 = math.tanh %5 : vector<8x128xf32>
    %c0_5 = arith.constant 0 : index
    %c0_6 = arith.constant 0 : index
    %7 = vector.load %arg3[%c0_5, %c0_6] : memref<128x128xf32, #tpu.memory_space<vmem>>, vector<128x128xf32>
    %cst_7 = arith.constant dense<0.000000e+00> : vector<8x128xf32>
    %8 = tpu.matmul %6, %7, %cst_7 {dimension_numbers = #tpu.dot_dimension_numbers<[1], [0], [0], [1], [0, 0, 1, 1], [], []>} : vector<8x128xf32>, vector<128x128xf32>, vector<8x128xf32> -> vector<8x128xf32>
    %c0_8 = arith.constant 0 : index
    %c0_9 = arith.constant 0 : index
    %9 = vector.load %arg5[%c0_8, %c0_9] : memref<1x128xf32, #tpu.memory_space<vmem>>, vector<1x128xf32>
    %10 = vector.broadcast %9 : vector<1x128xf32> to vector<8x128xf32>
    %11 = arith.addf %8, %10 : vector<8x128xf32>
    %c0_10 = arith.constant 0 : index
    %c0_11 = arith.constant 0 : index
    %12 = vector.load %arg6[%c0_10, %c0_11] : memref<8x128xf32, #tpu.memory_space<vmem>>, vector<8x128xf32>
    tpu.vector_store %arg6[%c0_10, %c0_11], %11 {strides = array<i32>} : memref<8x128xf32, #tpu.memory_space<vmem>>, vector<8x128xf32>,
    return
  }
  func.func @transform_0(%arg0: i32) -> (i32, i32) {
    %c0_i32 = arith.constant 0 : i32
    %c0_i32_0 = arith.constant 0 : i32
    return %arg0, %c0_i32 : i32, i32
  }
  func.func @transform_1(%arg0: i32) -> (i32, i32) {
    %c0_i32 = arith.constant 0 : i32
    %c0_i32_0 = arith.constant 0 : i32
    %c0_i32_1 = arith.constant 0 : i32
    return %c0_i32, %c0_i32_0 : i32, i32
  }
  func.func @transform_2(%arg0: i32) -> (i32, i32) {
    %c0_i32 = arith.constant 0 : i32
    %c0_i32_0 = arith.constant 0 : i32
    %c0_i32_1 = arith.constant 0 : i32
    return %c0_i32, %c0_i32_0 : i32, i32
  }
  func.func @transform_3(%arg0: i32) -> (i32, i32) {
    %c0_i32 = arith.constant 0 : i32
    %c0_i32_0 = arith.constant 0 : i32
    %c0_i32_1 = arith.constant 0 : i32
    return %c0_i32, %c0_i32_0 : i32, i32
  }
  func.func @transform_4(%arg0: i32) -> (i32, i32) {
    %c0_i32 = arith.constant 0 : i32
    %c0_i32_0 = arith.constant 0 : i32
    %c0_i32_1 = arith.constant 0 : i32
    return %c0_i32, %c0_i32_0 : i32, i32
  }
  func.func @transform_5(%arg0: i32) -> (i32, i32) {
    %c0_i32 = arith.constant 0 : i32
    %c0_i32_0 = arith.constant 0 : i32
    return %arg0, %c0_i32 : i32, i32
  }
}

</mosaic_0001>

<llo_original>
// kernel: neural_dnf_forward.1
$region0: #{neural_dnf_forward.1}
  #allocation0 [shape = 'u32[]', space=smem, size = 0x4, offset = 0x4, fixed_abs, tag = 'smem constant byte address 0x4 - core index']
  #allocation1 [shape = 'u32[144,128]{1,0:T(1,128)}', space=vmem, size = 0x12000, scoped, tag = 'internal scratch']
  %s0 = inlined_call_operand.vmem [shape: f32[8,32], index: 0, kind: input, shape index: {}]
  %s1 = inlined_call_operand.vmem [shape: f32[32,128], index: 1, kind: input, shape index: {}]
  %s2 = inlined_call_operand.vmem [shape: f32[128,128], index: 2, kind: input, shape index: {}]
  %s3 = inlined_call_operand.vmem [shape: f32[1,128], index: 3, kind: input, shape index: {}]
  %s4 = inlined_call_operand.vmem [shape: f32[1,128], index: 4, kind: input, shape index: {}]
  %s5 = inlined_call_operand.hbm [shape: f32[8,128], index: 5, kind: output, shape index: {}]
  %s6 = sld [smem:[#allocation0]]
  $region30: #{neural_dnf_forward.1} parent=0
    _
  %s8 = ssub.s32 1, %s6
  %s9 = scalar_select 0, %s8, %s6
  $region1: #{neural_dnf_forward.1} parent=0
    #allocation2 [shape = 'u8[4096]{0}', space=vmem, size = 0x1000, scoped, tag = 'output window, operand 0, single buffered']
    #allocation3 [shape = 's32[1]{0}', space=sflag, size = 0x4, scoped, tag = 'scoped memory for neural_dnf_forward.1']
    %10 = vsyncpa [#allocation3], 0
    // Predicated region
    $region2: #{neural_dnf_forward.1} parent=1 // pred_check
      _
    $region3: #{neural_dnf_forward.1} parent=1 // pred_check_branch
      %12 = sbr.rel (0) target = $region5
    $region4: #{neural_dnf_forward.1} parent=1 // pred_region
      _
    $region5: #{neural_dnf_forward.1} parent=1 // pred_fallthru
      _
    // Predicated region
    $region6: #{neural_dnf_forward.1} parent=1 // pred_check
      _
    $region7: #{neural_dnf_forward.1} parent=1 // pred_check_branch
      %14 = sbr.rel (0) target = $region9
    $region8: #{neural_dnf_forward.1} parent=1 // pred_region
      _
    $region9: #{neural_dnf_forward.1} parent=1 // pred_fallthru
      _
    // Predicated region
    $region10: #{neural_dnf_forward.1} parent=1 // pred_check
      _
    $region11: #{neural_dnf_forward.1} parent=1 // pred_check_branch
      %16 = sbr.rel (0) target = $region13
    $region12: #{neural_dnf_forward.1} parent=1 // pred_region
      _
    $region13: #{neural_dnf_forward.1} parent=1 // pred_fallthru
      _
    // Predicated region
    $region14: #{neural_dnf_forward.1} parent=1 // pred_check
      _
    $region15: #{neural_dnf_forward.1} parent=1 // pred_check_branch
      %18 = sbr.rel (0) target = $region17
    $region16: #{neural_dnf_forward.1} parent=1 // pred_region
      _
    $region17: #{neural_dnf_forward.1} parent=1 // pred_fallthru
      _
    // Predicated region
    $region18: #{neural_dnf_forward.1} parent=1 // pred_check
      _
    $region19: #{neural_dnf_forward.1} parent=1 // pred_check_branch
      %20 = sbr.rel (0) target = $region21
    $region20: #{neural_dnf_forward.1} parent=1 // pred_region
      _
    $region21: #{neural_dnf_forward.1} parent=1 // pred_fallthru
      _
    %v21 = vld [vmem:[%s0] sm:$0xff]
    %v22 = vld [vmem:[%s1] sm:$0xff]
    %v23 = vld [vmem:[%s1 + $0x8] sm:$0xff]
    %v24 = vld [vmem:[%s1 + $0x10] sm:$0xff]
    %v25 = vld [vmem:[%s1 + $0x18] sm:$0xff]
    %v26 = vld [vmem:[%s3] sm:$0x1]
    %v28 = vlaneseq
    %v29 = vshrl.u32 %v28, 7
    %v30 = vsub.s32 0, %v29
    %v31 = vrot.slane %v26, %v30
    %vm33 = vcmask 261120
    %v35 = vsel %vm33, %v21, 0
    %37 = vmatprep.subr.mxu0 0.0
    %38 = vmatpush1.msra.mxu0 %v22
    %39 = vmatprep.subr.mxu0 0.0
    %40 = vmatpush1.msra.mxu0 %v23
    %41 = vmatprep.subr.mxu0 0.0
    %42 = vmatpush1.msra.mxu0 %v24
    %43 = vmatprep.subr.mxu0 0.0
    %44 = vmatpush1.msra.mxu0 %v25
    %45 = vmatprep.subr.mxu0 0.0
    %46 = vmatpush1.msra.mxu0 0.0
    %47 = vmatprep.subr.mxu0 0.0
    %48 = vmatpush1.msra.mxu0 0.0
    %49 = vmatprep.subr.mxu0 0.0
    %50 = vmatpush1.msra.mxu0 0.0
    %51 = vmatprep.subr.mxu0 0.0
    %52 = vmatpush1.msra.mxu0 0.0
    %53 = vmatprep.subr.mxu0 0.0
    %54 = vmatpush1.msra.mxu0 0.0
    %55 = vmatprep.subr.mxu0 0.0
    %56 = vmatpush1.msra.mxu0 0.0
    %57 = vmatprep.subr.mxu0 0.0
    %58 = vmatpush1.msra.mxu0 0.0
    %59 = vmatprep.subr.mxu0 0.0
    %60 = vmatpush1.msra.mxu0 0.0
    %61 = vmatprep.subr.mxu0 0.0
    %62 = vmatpush1.msra.mxu0 0.0
    %63 = vmatprep.subr.mxu0 0.0
    %64 = vmatpush1.msra.mxu0 0.0
    %65 = vmatprep.subr.mxu0 0.0
    %66 = vmatpush1.msra.mxu0 0.0
    %67 = vmatprep.subr.mxu0 0.0
    %68 = vmatpush1.msra.mxu0 0.0
    %69 = vmatprep.subr.mxu0 0.0
    %70 = vmatpush1.msra.mxu0 0.0
    %71 = vmatprep.subr.mxu0 0.0
    %72 = vmatpush1.msra.mxu0 0.0
    %73 = vmatprep.subr.mxu0 0.0
    %74 = vmatpush1.msra.mxu0 0.0
    %75 = vmatprep.subr.mxu0 0.0
    %76 = vmatpush1.msra.mxu0 0.0
    %77 = vmatprep.subr.mxu0 0.0
    %78 = vmatpush1.msra.mxu0 0.0
    %79 = vmatprep.subr.mxu0 0.0
    %80 = vmatpush1.msra.mxu0 0.0
    %81 = vmatprep.subr.mxu0 0.0
    %82 = vmatpush1.msra.mxu0 0.0
    %83 = vmatprep.subr.mxu0 0.0
    %84 = vmatpush1.msra.mxu0 0.0
    %85 = vmatprep.subr.mxu0 0.0
    %86 = vmatpush1.msra.mxu0 0.0
    %87 = vmatprep.subr.mxu0 0.0
    %88 = vmatpush1.msra.mxu0 0.0
    %89 = vmatprep.subr.mxu0 0.0
    %90 = vmatpush1.msra.mxu0 0.0
    %91 = vmatprep.subr.mxu0 0.0
    %92 = vmatpush1.msra.mxu0 0.0
    %93 = vmatprep.subr.mxu0 0.0
    %94 = vmatpush1.msra.mxu0 0.0
    %95 = vmatprep.subr.mxu0 0.0
    %96 = vmatpush1.msra.mxu0 0.0
    %97 = vmatprep.subr.mxu0 0.0
    %98 = vmatpush1.msra.mxu0 0.0
    %99 = vmatprep.subr.mxu0 0.0
    %100 = vmatpush1.msra.mxu0 0.0
    %101 = vmatprep.mubr.f32.mxu0 0.0
    %102 = vmatmul.mubr.f32.gmra.mrb[0].mxu0 %v35
    %v103 = vpop.f32.mrb[0].mxu0
    %v104 = vadd.f32 %v31, %v103
    %v105 = vpop.f32.mrb[0].mxu0
    %106 = vdwg.mxu0
    %v107 = vtanh.pop %v104
    %v108 = vld [vmem:[%s2] sm:$0xff]
    %v109 = vld [vmem:[%s2 + $0x8] sm:$0xff]
    %v110 = vld [vmem:[%s2 + $0x10] sm:$0xff]
    %v111 = vld [vmem:[%s2 + $0x18] sm:$0xff]
    %v112 = vld [vmem:[%s2 + $0x20] sm:$0xff]
    %v113 = vld [vmem:[%s2 + $0x28] sm:$0xff]
    %v114 = vld [vmem:[%s2 + $0x30] sm:$0xff]
    %v115 = vld [vmem:[%s2 + $0x38] sm:$0xff]
    %v116 = vld [vmem:[%s2 + $0x40] sm:$0xff]
    %v117 = vld [vmem:[%s2 + $0x48] sm:$0xff]
    %v118 = vld [vmem:[%s2 + $0x50] sm:$0xff]
    %v119 = vld [vmem:[%s2 + $0x58] sm:$0xff]
    %v120 = vld [vmem:[%s2 + $0x60] sm:$0xff]
    %v121 = vld [vmem:[%s2 + $0x68] sm:$0xff]
    %v122 = vld [vmem:[%s2 + $0x70] sm:$0xff]
    %v123 = vld [vmem:[%s2 + $0x78] sm:$0xff]
    %v124 = vld [vmem:[%s4] sm:$0x1]
    %v126 = vlaneseq
    %v127 = vshrl.u32 %v126, 7
    %v128 = vsub.s32 0, %v127
    %v129 = vrot.slane %v124, %v128
    %131 = vmatprep.subr.mxu0 0.0
    %132 = vmatpush1.msra.mxu0 %v108
    %133 = vmatprep.subr.mxu0 0.0
    %134 = vmatpush1.msra.mxu0 %v109
    %135 = vmatprep.subr.mxu0 0.0
    %136 = vmatpush1.msra.mxu0 %v110
    %137 = vmatprep.subr.mxu0 0.0
    %138 = vmatpush1.msra.mxu0 %v111
    %139 = vmatprep.subr.mxu0 0.0
    %140 = vmatpush1.msra.mxu0 %v112
    %141 = vmatprep.subr.mxu0 0.0
    %142 = vmatpush1.msra.mxu0 %v113
    %143 = vmatprep.subr.mxu0 0.0
    %144 = vmatpush1.msra.mxu0 %v114
    %145 = vmatprep.subr.mxu0 0.0
    %146 = vmatpush1.msra.mxu0 %v115
    %147 = vmatprep.subr.mxu0 0.0
    %148 = vmatpush1.msra.mxu0 %v116
    %149 = vmatprep.subr.mxu0 0.0
    %150 = vmatpush1.msra.mxu0 %v117
    %151 = vmatprep.subr.mxu0 0.0
    %152 = vmatpush1.msra.mxu0 %v118
    %153 = vmatprep.subr.mxu0 0.0
    %154 = vmatpush1.msra.mxu0 %v119
    %155 = vmatprep.subr.mxu0 0.0
    %156 = vmatpush1.msra.mxu0 %v120
    %157 = vmatprep.subr.mxu0 0.0
    %158 = vmatpush1.msra.mxu0 %v121
    %159 = vmatprep.subr.mxu0 0.0
    %160 = vmatpush1.msra.mxu0 %v122
    %161 = vmatprep.subr.mxu0 0.0
    %162 = vmatpush1.msra.mxu0 %v123
    %163 = vmatprep.subr.mxu0 0.0
    %164 = vmatpush1.msra.mxu0 0.0
    %165 = vmatprep.subr.mxu0 0.0
    %166 = vmatpush1.msra.mxu0 0.0
    %167 = vmatprep.subr.mxu0 0.0
    %168 = vmatpush1.msra.mxu0 0.0
    %169 = vmatprep.subr.mxu0 0.0
    %170 = vmatpush1.msra.mxu0 0.0
    %171 = vmatprep.subr.mxu0 0.0
    %172 = vmatpush1.msra.mxu0 0.0
    %173 = vmatprep.subr.mxu0 0.0
    %174 = vmatpush1.msra.mxu0 0.0
    %175 = vmatprep.subr.mxu0 0.0
    %176 = vmatpush1.msra.mxu0 0.0
    %177 = vmatprep.subr.mxu0 0.0
    %178 = vmatpush1.msra.mxu0 0.0
    %179 = vmatprep.subr.mxu0 0.0
    %180 = vmatpush1.msra.mxu0 0.0
    %181 = vmatprep.subr.mxu0 0.0
    %182 = vmatpush1.msra.mxu0 0.0
    %183 = vmatprep.subr.mxu0 0.0
    %184 = vmatpush1.msra.mxu0 0.0
    %185 = vmatprep.subr.mxu0 0.0
    %186 = vmatpush1.msra.mxu0 0.0
    %187 = vmatprep.subr.mxu0 0.0
    %188 = vmatpush1.msra.mxu0 0.0
    %189 = vmatprep.subr.mxu0 0.0
    %190 = vmatpush1.msra.mxu0 0.0
    %191 = vmatprep.subr.mxu0 0.0
    %192 = vmatpush1.msra.mxu0 0.0
    %193 = vmatprep.subr.mxu0 0.0
    %194 = vmatpush1.msra.mxu0 0.0
    %195 = vmatprep.mubr.f32.mxu0 0.0
    %196 = vmatmul.mubr.f32.gmra.mrb[0].mxu0 %v107
    %v197 = vpop.f32.mrb[0].mxu0
    %v198 = vadd.f32 %v129, %v197
    %v199 = vpop.f32.mrb[0].mxu0
    %200 = vdwg.mxu0
    %201 = vst [vmem:[#allocation2] sm:$0xff] %v198
    // Predicated region
    $region22: #{neural_dnf_forward.1} parent=1 // pred_check
      _
    $region23: #{neural_dnf_forward.1} parent=1 // pred_check_branch
      %203 = sbr.rel (0) target = $region25
    $region24: #{neural_dnf_forward.1} parent=1 // pred_region
      %s205 = ssub.s32 128, 128
      %206 = vsyncadd [#allocation3], %s205
      %s208 = sshll.u32 [#allocation2], 4
      %s209 = int_to_ptr.vmem [resolvable:$true] %s208
      %211 = dma.vmem_to_hbm [thread:$0]  %s209, 128, %s5, [#allocation3]
    $region25: #{neural_dnf_forward.1} parent=1 // pred_fallthru
      _
    // Predicated region
    $region26: #{neural_dnf_forward.1} parent=1 // pred_check
      _
    $region27: #{neural_dnf_forward.1} parent=1 // pred_check_branch
      %213 = sbr.rel (0) target = $region29
    $region28: #{neural_dnf_forward.1} parent=1 // pred_region
      %214 = dma.done [#allocation3], 128
    $region29: #{neural_dnf_forward.1} parent=1 // pred_fallthru
      _
    %215 = vsyncpa [#allocation3], 1

</llo_original>
